<compile_context>
chip_gen: v5e
topology: v5e:2x2
jax: 0.10.0
libtpu: 0.0.40
codegen_flags: <defaults>
</compile_context>

<pallas_src>
import math

import jax
import jax.numpy as jnp
from jax.experimental import pallas as pl
from jax.experimental.pallas import tpu as pltpu

VOCAB = 32        # vocab_size
EMBED_DIM = 128   # embed_dim (multiple of 128 -> lane-dense vregs/stores)
B, S = 2, 8       # batch, sequence


def embedding_kernel(ids_ref, table_ref, out_ref):
    """out[i, :] = table[ids[i], :] * sqrt(D)

    ids_ref:   SMEM (N,)  int32   (scalar-prefetched token ids)
    table_ref: VMEM (V, D) f32    (full embedding table, resident)
    out_ref:   VMEM (N, D) f32
    """
    n = out_ref.shape[0]
    d = table_ref.shape[1]
    scale = math.sqrt(float(d))          # trace-time constant, folded into vmul
    for i in range(n):                   # static unroll; N = B*S is small
        tok = ids_ref[i]                 # scalar read from SMEM
        row = table_ref[pl.ds(tok, 1), :]        # (1, D) dynamic-row gather
        out_ref[pl.ds(i, 1), :] = row * scale    # fused scale + lane-dense store


def embedding(ids, table):
    """ids: (B, S) integer tokens; table: (V, D) f32. Returns (B, S, D) f32."""
    b, s = ids.shape
    v, d = table.shape
    n = b * s
    ids_flat = ids.reshape(n).astype(jnp.int32)

    out = pl.pallas_call(
        embedding_kernel,
        out_shape=jax.ShapeDtypeStruct((n, d), jnp.float32),
        grid_spec=pltpu.PrefetchScalarGridSpec(
            num_scalar_prefetch=1,                 # ids -> SMEM, visible to index maps
            grid=(1,),                             # single step: no pipeline overhead
            in_specs=[pl.BlockSpec((v, d), lambda g, ids_ref: (0, 0))],   # whole table
            out_specs=pl.BlockSpec((n, d), lambda g, ids_ref: (0, 0)),
        ),
        compiler_params=pltpu.CompilerParams(
            dimension_semantics=("arbitrary",)),
    )(ids_flat, table)
    return out.reshape(b, s, d)


def ref_embedding(ids, table):
    """Pure-JAX reference matching the PyTorch module."""
    return table[ids] * math.sqrt(float(table.shape[1]))


if __name__ == "__main__":
    key = jax.random.PRNGKey(0)
    k_tab, k_ids = jax.random.split(key)
    table = jax.random.normal(k_tab, (VOCAB, EMBED_DIM), jnp.float32)
    ids = jax.random.randint(k_ids, (B, S), 0, VOCAB, dtype=jnp.int32)

    out = jax.block_until_ready(embedding(ids, table))
    ref = jax.block_until_ready(ref_embedding(ids, table))

    assert out.shape == (B, S, EMBED_DIM)
    assert jnp.allclose(out, ref, atol=1e-5, rtol=1e-5), (
        float(jnp.max(jnp.abs(out - ref))))
    print("KERNEL_OK")
</pallas_src>

<mosaic_0001>
module attributes {stable_mosaic.version = 11 : i64} {
  func.func @embedding_kernel(%arg0: i32, %arg1: memref<16xi32, #tpu.memory_space<smem>>, %arg2: memref<32x128xf32, #tpu.memory_space<vmem>>, %arg3: memref<16x128xf32, #tpu.memory_space<vmem>>) attributes {dimension_semantics = [#tpu.dimension_semantics<arbitrary>], iteration_bounds = array<i64: 1>, scalar_prefetch = 1 : i64, scratch_operands = 0 : i64, tpu.core_type = #tpu.core_type<tc>, window_params = [{pipeline_mode = #tpu.pipeline_mode<synchronous>, transform_indices = @transform_0, window_bounds = array<i64: 32, 128>}, {pipeline_mode = #tpu.pipeline_mode<synchronous>, transform_indices = @transform_1, window_bounds = array<i64: 16, 128>}]} {
    %c0 = arith.constant 0 : index
    %0 = memref.load %arg1[%c0] : memref<16xi32, #tpu.memory_space<smem>>
    %1 = arith.index_cast %0 : i32 to index
    %c0_0 = arith.constant 0 : index
    %2 = vector.load %arg2[%1, %c0_0] : memref<32x128xf32, #tpu.memory_space<vmem>>, vector<1x128xf32>
    %cst = arith.constant 11.3137083 : f32
    %3 = vector.broadcast %cst : f32 to vector<1x128xf32>
    %4 = arith.mulf %2, %3 : vector<1x128xf32>
    %c0_1 = arith.constant 0 : index
    %c0_2 = arith.constant 0 : index
    %5 = vector.load %arg3[%c0_1, %c0_2] : memref<16x128xf32, #tpu.memory_space<vmem>>, vector<1x128xf32>
    tpu.vector_store %arg3[%c0_1, %c0_2], %4 {strides = array<i32>} : memref<16x128xf32, #tpu.memory_space<vmem>>, vector<1x128xf32>,
    %c1 = arith.constant 1 : index
    %6 = memref.load %arg1[%c1] : memref<16xi32, #tpu.memory_space<smem>>
    %7 = arith.index_cast %6 : i32 to index
    %c0_3 = arith.constant 0 : index
    %8 = vector.load %arg2[%7, %c0_3] : memref<32x128xf32, #tpu.memory_space<vmem>>, vector<1x128xf32>
    %cst_4 = arith.constant 11.3137083 : f32
    %9 = vector.broadcast %cst_4 : f32 to vector<1x128xf32>
    %10 = arith.mulf %8, %9 : vector<1x128xf32>
    %c1_5 = arith.constant 1 : index
    %c0_6 = arith.constant 0 : index
    %11 = vector.load %arg3[%c1_5, %c0_6] : memref<16x128xf32, #tpu.memory_space<vmem>>, vector<1x128xf32>
    tpu.vector_store %arg3[%c1_5, %c0_6], %10 {strides = array<i32>} : memref<16x128xf32, #tpu.memory_space<vmem>>, vector<1x128xf32>,
    %c2 = arith.constant 2 : index
    %12 = memref.load %arg1[%c2] : memref<16xi32, #tpu.memory_space<smem>>
    %13 = arith.index_cast %12 : i32 to index
    %c0_7 = arith.constant 0 : index
    %14 = vector.load %arg2[%13, %c0_7] : memref<32x128xf32, #tpu.memory_space<vmem>>, vector<1x128xf32>
    %cst_8 = arith.constant 11.3137083 : f32
    %15 = vector.broadcast %cst_8 : f32 to vector<1x128xf32>
    %16 = arith.mulf %14, %15 : vector<1x128xf32>
    %c2_9 = arith.constant 2 : index
    %c0_10 = arith.constant 0 : index
    %17 = vector.load %arg3[%c2_9, %c0_10] : memref<16x128xf32, #tpu.memory_space<vmem>>, vector<1x128xf32>
    tpu.vector_store %arg3[%c2_9, %c0_10], %16 {strides = array<i32>} : memref<16x128xf32, #tpu.memory_space<vmem>>, vector<1x128xf32>,
    %c3 = arith.constant 3 : index
    %18 = memref.load %arg1[%c3] : memref<16xi32, #tpu.memory_space<smem>>
    %19 = arith.index_cast %18 : i32 to index
    %c0_11 = arith.constant 0 : index
    %20 = vector.load %arg2[%19, %c0_11] : memref<32x128xf32, #tpu.memory_space<vmem>>, vector<1x128xf32>
    %cst_12 = arith.constant 11.3137083 : f32
    %21 = vector.broadcast %cst_12 : f32 to vector<1x128xf32>
    %22 = arith.mulf %20, %21 : vector<1x128xf32>
    %c3_13 = arith.constant 3 : index
    %c0_14 = arith.constant 0 : index
    %23 = vector.load %arg3[%c3_13, %c0_14] : memref<16x128xf32, #tpu.memory_space<vmem>>, vector<1x128xf32>
    tpu.vector_store %arg3[%c3_13, %c0_14], %22 {strides = array<i32>} : memref<16x128xf32, #tpu.memory_space<vmem>>, vector<1x128xf32>,
    %c4 = arith.constant 4 : index
    %24 = memref.load %arg1[%c4] : memref<16xi32, #tpu.memory_space<smem>>
    %25 = arith.index_cast %24 : i32 to index
    %c0_15 = arith.constant 0 : index
    %26 = vector.load %arg2[%25, %c0_15] : memref<32x128xf32, #tpu.memory_space<vmem>>, vector<1x128xf32>
    %cst_16 = arith.constant 11.3137083 : f32
    %27 = vector.broadcast %cst_16 : f32 to vector<1x128xf32>
    %28 = arith.mulf %26, %27 : vector<1x128xf32>
    %c4_17 = arith.constant 4 : index
    %c0_18 = arith.constant 0 : index
    %29 = vector.load %arg3[%c4_17, %c0_18] : memref<16x128xf32, #tpu.memory_space<vmem>>, vector<1x128xf32>
    tpu.vector_store %arg3[%c4_17, %c0_18], %28 {strides = array<i32>} : memref<16x128xf32, #tpu.memory_space<vmem>>, vector<1x128xf32>,
    %c5 = arith.constant 5 : index
    %30 = memref.load %arg1[%c5] : memref<16xi32, #tpu.memory_space<smem>>
    %31 = arith.index_cast %30 : i32 to index
    %c0_19 = arith.constant 0 : index
    %32 = vector.load %arg2[%31, %c0_19] : memref<32x128xf32, #tpu.memory_space<vmem>>, vector<1x128xf32>
    %cst_20 = arith.constant 11.3137083 : f32
    %33 = vector.broadcast %cst_20 : f32 to vector<1x128xf32>
    %34 = arith.mulf %32, %33 : vector<1x128xf32>
    %c5_21 = arith.constant 5 : index
    %c0_22 = arith.constant 0 : index
    %35 = vector.load %arg3[%c5_21, %c0_22] : memref<16x128xf32, #tpu.memory_space<vmem>>, vector<1x128xf32>
    tpu.vector_store %arg3[%c5_21, %c0_22], %34 {strides = array<i32>} : memref<16x128xf32, #tpu.memory_space<vmem>>, vector<1x128xf32>,
    %c6 = arith.constant 6 : index
    %36 = memref.load %arg1[%c6] : memref<16xi32, #tpu.memory_space<smem>>
    %37 = arith.index_cast %36 : i32 to index
    %c0_23 = arith.constant 0 : index
    %38 = vector.load %arg2[%37, %c0_23] : memref<32x128xf32, #tpu.memory_space<vmem>>, vector<1x128xf32>
    %cst_24 = arith.constant 11.3137083 : f32
    %39 = vector.broadcast %cst_24 : f32 to vector<1x128xf32>
    %40 = arith.mulf %38, %39 : vector<1x128xf32>
    %c6_25 = arith.constant 6 : index
    %c0_26 = arith.constant 0 : index
    %41 = vector.load %arg3[%c6_25, %c0_26] : memref<16x128xf32, #tpu.memory_space<vmem>>, vector<1x128xf32>
    tpu.vector_store %arg3[%c6_25, %c0_26], %40 {strides = array<i32>} : memref<16x128xf32, #tpu.memory_space<vmem>>, vector<1x128xf32>,
    %c7 = arith.constant 7 : index
    %42 = memref.load %arg1[%c7] : memref<16xi32, #tpu.memory_space<smem>>
    %43 = arith.index_cast %42 : i32 to index
    %c0_27 = arith.constant 0 : index
    %44 = vector.load %arg2[%43, %c0_27] : memref<32x128xf32, #tpu.memory_space<vmem>>, vector<1x128xf32>
    %cst_28 = arith.constant 11.3137083 : f32
    %45 = vector.broadcast %cst_28 : f32 to vector<1x128xf32>
    %46 = arith.mulf %44, %45 : vector<1x128xf32>
    %c7_29 = arith.constant 7 : index
    %c0_30 = arith.constant 0 : index
    %47 = vector.load %arg3[%c7_29, %c0_30] : memref<16x128xf32, #tpu.memory_space<vmem>>, vector<1x128xf32>
    tpu.vector_store %arg3[%c7_29, %c0_30], %46 {strides = array<i32>} : memref<16x128xf32, #tpu.memory_space<vmem>>, vector<1x128xf32>,
    %c8 = arith.constant 8 : index
    %48 = memref.load %arg1[%c8] : memref<16xi32, #tpu.memory_space<smem>>
    %49 = arith.index_cast %48 : i32 to index
    %c0_31 = arith.constant 0 : index
    %50 = vector.load %arg2[%49, %c0_31] : memref<32x128xf32, #tpu.memory_space<vmem>>, vector<1x128xf32>
    %cst_32 = arith.constant 11.3137083 : f32
    %51 = vector.broadcast %cst_32 : f32 to vector<1x128xf32>
    %52 = arith.mulf %50, %51 : vector<1x128xf32>
    %c8_33 = arith.constant 8 : index
    %c0_34 = arith.constant 0 : index
    %53 = vector.load %arg3[%c8_33, %c0_34] : memref<16x128xf32, #tpu.memory_space<vmem>>, vector<1x128xf32>
    tpu.vector_store %arg3[%c8_33, %c0_34], %52 {strides = array<i32>} : memref<16x128xf32, #tpu.memory_space<vmem>>, vector<1x128xf32>,
    %c9 = arith.constant 9 : index
    %54 = memref.load %arg1[%c9] : memref<16xi32, #tpu.memory_space<smem>>
    %55 = arith.index_cast %54 : i32 to index
    %c0_35 = arith.constant 0 : index
    %56 = vector.load %arg2[%55, %c0_35] : memref<32x128xf32, #tpu.memory_space<vmem>>, vector<1x128xf32>
    %cst_36 = arith.constant 11.3137083 : f32
    %57 = vector.broadcast %cst_36 : f32 to vector<1x128xf32>
    %58 = arith.mulf %56, %57 : vector<1x128xf32>
    %c9_37 = arith.constant 9 : index
    %c0_38 = arith.constant 0 : index
    %59 = vector.load %arg3[%c9_37, %c0_38] : memref<16x128xf32, #tpu.memory_space<vmem>>, vector<1x128xf32>
    tpu.vector_store %arg3[%c9_37, %c0_38], %58 {strides = array<i32>} : memref<16x128xf32, #tpu.memory_space<vmem>>, vector<1x128xf32>,
    %c10 = arith.constant 10 : index
    %60 = memref.load %arg1[%c10] : memref<16xi32, #tpu.memory_space<smem>>
    %61 = arith.index_cast %60 : i32 to index
    %c0_39 = arith.constant 0 : index
    %62 = vector.load %arg2[%61, %c0_39] : memref<32x128xf32, #tpu.memory_space<vmem>>, vector<1x128xf32>
    %cst_40 = arith.constant 11.3137083 : f32
    %63 = vector.broadcast %cst_40 : f32 to vector<1x128xf32>
    %64 = arith.mulf %62, %63 : vector<1x128xf32>
    %c10_41 = arith.constant 10 : index
    %c0_42 = arith.constant 0 : index
    %65 = vector.load %arg3[%c10_41, %c0_42] : memref<16x128xf32, #tpu.memory_space<vmem>>, vector<1x128xf32>
    tpu.vector_store %arg3[%c10_41, %c0_42], %64 {strides = array<i32>} : memref<16x128xf32, #tpu.memory_space<vmem>>, vector<1x128xf32>,
    %c11 = arith.constant 11 : index
    %66 = memref.load %arg1[%c11] : memref<16xi32, #tpu.memory_space<smem>>
    %67 = arith.index_cast %66 : i32 to index
    %c0_43 = arith.constant 0 : index
    %68 = vector.load %arg2[%67, %c0_43] : memref<32x128xf32, #tpu.memory_space<vmem>>, vector<1x128xf32>
    %cst_44 = arith.constant 11.3137083 : f32
    %69 = vector.broadcast %cst_44 : f32 to vector<1x128xf32>
    %70 = arith.mulf %68, %69 : vector<1x128xf32>
    %c11_45 = arith.constant 11 : index
    %c0_46 = arith.constant 0 : index
    %71 = vector.load %arg3[%c11_45, %c0_46] : memref<16x128xf32, #tpu.memory_space<vmem>>, vector<1x128xf32>
    tpu.vector_store %arg3[%c11_45, %c0_46], %70 {strides = array<i32>} : memref<16x128xf32, #tpu.memory_space<vmem>>, vector<1x128xf32>,
    %c12 = arith.constant 12 : index
    %72 = memref.load %arg1[%c12] : memref<16xi32, #tpu.memory_space<smem>>
    %73 = arith.index_cast %72 : i32 to index
    %c0_47 = arith.constant 0 : index
    %74 = vector.load %arg2[%73, %c0_47] : memref<32x128xf32, #tpu.memory_space<vmem>>, vector<1x128xf32>
    %cst_48 = arith.constant 11.3137083 : f32
    %75 = vector.broadcast %cst_48 : f32 to vector<1x128xf32>
    %76 = arith.mulf %74, %75 : vector<1x128xf32>
    %c12_49 = arith.constant 12 : index
    %c0_50 = arith.constant 0 : index
    %77 = vector.load %arg3[%c12_49, %c0_50] : memref<16x128xf32, #tpu.memory_space<vmem>>, vector<1x128xf32>
    tpu.vector_store %arg3[%c12_49, %c0_50], %76 {strides = array<i32>} : memref<16x128xf32, #tpu.memory_space<vmem>>, vector<1x128xf32>,
    %c13 = arith.constant 13 : index
    %78 = memref.load %arg1[%c13] : memref<16xi32, #tpu.memory_space<smem>>
    %79 = arith.index_cast %78 : i32 to index
    %c0_51 = arith.constant 0 : index
    %80 = vector.load %arg2[%79, %c0_51] : memref<32x128xf32, #tpu.memory_space<vmem>>, vector<1x128xf32>
    %cst_52 = arith.constant 11.3137083 : f32
    %81 = vector.broadcast %cst_52 : f32 to vector<1x128xf32>
    %82 = arith.mulf %80, %81 : vector<1x128xf32>
    %c13_53 = arith.constant 13 : index
    %c0_54 = arith.constant 0 : index
    %83 = vector.load %arg3[%c13_53, %c0_54] : memref<16x128xf32, #tpu.memory_space<vmem>>, vector<1x128xf32>
    tpu.vector_store %arg3[%c13_53, %c0_54], %82 {strides = array<i32>} : memref<16x128xf32, #tpu.memory_space<vmem>>, vector<1x128xf32>,
    %c14 = arith.constant 14 : index
    %84 = memref.load %arg1[%c14] : memref<16xi32, #tpu.memory_space<smem>>
    %85 = arith.index_cast %84 : i32 to index
    %c0_55 = arith.constant 0 : index
    %86 = vector.load %arg2[%85, %c0_55] : memref<32x128xf32, #tpu.memory_space<vmem>>, vector<1x128xf32>
    %cst_56 = arith.constant 11.3137083 : f32
    %87 = vector.broadcast %cst_56 : f32 to vector<1x128xf32>
    %88 = arith.mulf %86, %87 : vector<1x128xf32>
    %c14_57 = arith.constant 14 : index
    %c0_58 = arith.constant 0 : index
    %89 = vector.load %arg3[%c14_57, %c0_58] : memref<16x128xf32, #tpu.memory_space<vmem>>, vector<1x128xf32>
    tpu.vector_store %arg3[%c14_57, %c0_58], %88 {strides = array<i32>} : memref<16x128xf32, #tpu.memory_space<vmem>>, vector<1x128xf32>,
    %c15 = arith.constant 15 : index
    %90 = memref.load %arg1[%c15] : memref<16xi32, #tpu.memory_space<smem>>
    %91 = arith.index_cast %90 : i32 to index
    %c0_59 = arith.constant 0 : index
    %92 = vector.load %arg2[%91, %c0_59] : memref<32x128xf32, #tpu.memory_space<vmem>>, vector<1x128xf32>
    %cst_60 = arith.constant 11.3137083 : f32
    %93 = vector.broadcast %cst_60 : f32 to vector<1x128xf32>
    %94 = arith.mulf %92, %93 : vector<1x128xf32>
    %c15_61 = arith.constant 15 : index
    %c0_62 = arith.constant 0 : index
    %95 = vector.load %arg3[%c15_61, %c0_62] : memref<16x128xf32, #tpu.memory_space<vmem>>, vector<1x128xf32>
    tpu.vector_store %arg3[%c15_61, %c0_62], %94 {strides = array<i32>} : memref<16x128xf32, #tpu.memory_space<vmem>>, vector<1x128xf32>,
    return
  }
  func.func @transform_0(%arg0: i32, %arg1: memref<16xi32, #tpu.memory_space<smem>>) -> (i32, i32) {
    %c0_i32 = arith.constant 0 : i32
    %c0_i32_0 = arith.constant 0 : i32
    %c0_i32_1 = arith.constant 0 : i32
    return %c0_i32, %c0_i32_0 : i32, i32
  }
  func.func @transform_1(%arg0: i32, %arg1: memref<16xi32, #tpu.memory_space<smem>>) -> (i32, i32) {
    %c0_i32 = arith.constant 0 : i32
    %c0_i32_0 = arith.constant 0 : i32
    %c0_i32_1 = arith.constant 0 : i32
    return %c0_i32, %c0_i32_0 : i32, i32
  }
}

</mosaic_0001>

<llo_original>
// kernel: tpu_custom_call.1
$region0: #{tpu_custom_call.1}
  #allocation0 [shape = 'u32[]', space=smem, size = 0x4, offset = 0x4, fixed_abs, tag = 'smem constant byte address 0x4 - core index']
  #allocation1 [shape = 'u32[72,128]{1,0:T(1,128)}', space=vmem, size = 0x9000, scoped, tag = 'internal scratch']
  #allocation2 [shape = 's32[1]{0}', space=sflag, size = 0x4, scoped, tag = 'scoped memory for tpu_custom_call.1']
  #allocation3 [shape = 'u8[512]{0}', space=smem, size = 0x200, scoped, tag = 'prefetched SMEM operand 0']
  %s0 = inlined_call_operand.hbm [shape: s32[16], index: 0, kind: input, shape index: {}]
  %s1 = inlined_call_operand.hbm [shape: f32[32,128], index: 1, kind: input, shape index: {}]
  %s2 = inlined_call_operand.hbm [shape: f32[16,128], index: 2, kind: output, shape index: {}]
  %s3 = sld [smem:[#allocation0]]
  $region18: #{tpu_custom_call.1} parent=0
    _
  %s5 = ssub.s32 1, %s3
  %s6 = scalar_select 0, %s5, %s3
  %s8 = sshll.u32 %s0, 4
  %s9 = int_to_ptr.hbm [resolvable:$true] %s8
  %11 = dma.hbm_to_smem %s9, 16, [#allocation3], [#allocation2]
  %13 = dma.done [#allocation2], 16
  %14 = sfence
  $region1: #{tpu_custom_call.1} parent=0
    #allocation4 [shape = 'u8[16384]{0}', space=vmem, size = 0x4000, scoped, tag = 'input window, operand 1, single buffered']
    #allocation5 [shape = 's32[1]{0}', space=sflag, size = 0x4, scoped, tag = 'scoped memory for tpu_custom_call.1']
    #allocation6 [shape = 's32[1]{0}', space=sflag, size = 0x4, scoped, tag = 'scoped memory for tpu_custom_call.1']
    #allocation7 [shape = 'u8[8192]{0}', space=vmem, size = 0x2000, scoped, tag = 'output window, operand 0, single buffered']
    %15 = vsyncpa [#allocation5], 0
    %16 = vsyncpa [#allocation6], 0
    // Predicated region
    $region2: #{tpu_custom_call.1} parent=1 // pred_check
      _
    $region3: #{tpu_custom_call.1} parent=1 // pred_check_branch
      %18 = sbr.rel (0) target = $region5
    $region4: #{tpu_custom_call.1} parent=1 // pred_region
      %20 = vsyncadd [#allocation5], 0
      %s21 = sshll.u32 %s1, 4
      %s22 = int_to_ptr.hbm [resolvable:$true] %s21
      %s23 = sshll.u32 [#allocation4], 4
      %s24 = int_to_ptr.vmem [resolvable:$true] %s23
      %29 = dma.hbm_to_vmem [thread:$0]  %s22, 512, %s24, [#allocation5], 128, 128, 8
    $region5: #{tpu_custom_call.1} parent=1 // pred_fallthru
      _
    // Predicated region
    $region6: #{tpu_custom_call.1} parent=1 // pred_check
      _
    $region7: #{tpu_custom_call.1} parent=1 // pred_check_branch
      %31 = sbr.rel (0) target = $region9
    $region8: #{tpu_custom_call.1} parent=1 // pred_region
      %33 = dma.done [#allocation5], 512
    $region9: #{tpu_custom_call.1} parent=1 // pred_fallthru
      _
    %s34 = sld [smem:[#allocation3]]
    %s35 = scalar_lea.vmem [#allocation4], %s34
    %v36 = vld [vmem:[%s35] sm:$0x1]
    %v37 = vmul.f32 %v36, 11.313708
    %38 = vst [vmem:[#allocation7] sm:$0x1] %v37
    %s39 = sld [smem:[#allocation3 + $0x1]]
    %s40 = scalar_lea.vmem [#allocation4], %s39
    %v41 = vld [vmem:[%s40] sm:$0x1]
    %v42 = vmul.f32 %v41, 11.313708
    %43 = vst [vmem:[#allocation7 + $0x1] sm:$0x1] %v42
    %s44 = sld [smem:[#allocation3 + $0x2]]
    %s45 = scalar_lea.vmem [#allocation4], %s44
    %v46 = vld [vmem:[%s45] sm:$0x1]
    %v47 = vmul.f32 %v46, 11.313708
    %48 = vst [vmem:[#allocation7 + $0x2] sm:$0x1] %v47
    %s49 = sld [smem:[#allocation3 + $0x3]]
    %s50 = scalar_lea.vmem [#allocation4], %s49
    %v51 = vld [vmem:[%s50] sm:$0x1]
    %v52 = vmul.f32 %v51, 11.313708
    %53 = vst [vmem:[#allocation7 + $0x3] sm:$0x1] %v52
    %s54 = sld [smem:[#allocation3 + $0x4]]
    %s55 = scalar_lea.vmem [#allocation4], %s54
    %v56 = vld [vmem:[%s55] sm:$0x1]
    %v57 = vmul.f32 %v56, 11.313708
    %58 = vst [vmem:[#allocation7 + $0x4] sm:$0x1] %v57
    %s59 = sld [smem:[#allocation3 + $0x5]]
    %s60 = scalar_lea.vmem [#allocation4], %s59
    %v61 = vld [vmem:[%s60] sm:$0x1]
    %v62 = vmul.f32 %v61, 11.313708
    %63 = vst [vmem:[#allocation7 + $0x5] sm:$0x1] %v62
    %s64 = sld [smem:[#allocation3 + $0x6]]
    %s65 = scalar_lea.vmem [#allocation4], %s64
    %v66 = vld [vmem:[%s65] sm:$0x1]
    %v67 = vmul.f32 %v66, 11.313708
    %68 = vst [vmem:[#allocation7 + $0x6] sm:$0x1] %v67
    %s69 = sld [smem:[#allocation3 + $0x7]]
    %s70 = scalar_lea.vmem [#allocation4], %s69
    %v71 = vld [vmem:[%s70] sm:$0x1]
    %v72 = vmul.f32 %v71, 11.313708
    %73 = vst [vmem:[#allocation7 + $0x7] sm:$0x1] %v72
    %s74 = sld [smem:[#allocation3 + $0x8]]
    %s75 = scalar_lea.vmem [#allocation4], %s74
    %v76 = vld [vmem:[%s75] sm:$0x1]
    %v77 = vmul.f32 %v76, 11.313708
    %78 = vst [vmem:[#allocation7 + $0x8] sm:$0x1] %v77
    %s79 = sld [smem:[#allocation3 + $0x9]]
    %s80 = scalar_lea.vmem [#allocation4], %s79
    %v81 = vld [vmem:[%s80] sm:$0x1]
    %v82 = vmul.f32 %v81, 11.313708
    %83 = vst [vmem:[#allocation7 + $0x9] sm:$0x1] %v82
    %s84 = sld [smem:[#allocation3 + $0xa]]
    %s85 = scalar_lea.vmem [#allocation4], %s84
    %v86 = vld [vmem:[%s85] sm:$0x1]
    %v87 = vmul.f32 %v86, 11.313708
    %88 = vst [vmem:[#allocation7 + $0xa] sm:$0x1] %v87
    %s89 = sld [smem:[#allocation3 + $0xb]]
    %s90 = scalar_lea.vmem [#allocation4], %s89
    %v91 = vld [vmem:[%s90] sm:$0x1]
    %v92 = vmul.f32 %v91, 11.313708
    %93 = vst [vmem:[#allocation7 + $0xb] sm:$0x1] %v92
    %s94 = sld [smem:[#allocation3 + $0xc]]
    %s95 = scalar_lea.vmem [#allocation4], %s94
    %v96 = vld [vmem:[%s95] sm:$0x1]
    %v97 = vmul.f32 %v96, 11.313708
    %98 = vst [vmem:[#allocation7 + $0xc] sm:$0x1] %v97
    %s99 = sld [smem:[#allocation3 + $0xd]]
    %s100 = scalar_lea.vmem [#allocation4], %s99
    %v101 = vld [vmem:[%s100] sm:$0x1]
    %v102 = vmul.f32 %v101, 11.313708
    %103 = vst [vmem:[#allocation7 + $0xd] sm:$0x1] %v102
    %s104 = sld [smem:[#allocation3 + $0xe]]
    %s105 = scalar_lea.vmem [#allocation4], %s104
    %v106 = vld [vmem:[%s105] sm:$0x1]
    %v107 = vmul.f32 %v106, 11.313708
    %108 = vst [vmem:[#allocation7 + $0xe] sm:$0x1] %v107
    %s109 = sld [smem:[#allocation3 + $0xf]]
    %s110 = scalar_lea.vmem [#allocation4], %s109
    %v111 = vld [vmem:[%s110] sm:$0x1]
    %v112 = vmul.f32 %v111, 11.313708
    %113 = vst [vmem:[#allocation7 + $0xf] sm:$0x1] %v112
    // Predicated region
    $region10: #{tpu_custom_call.1} parent=1 // pred_check
      _
    $region11: #{tpu_custom_call.1} parent=1 // pred_check_branch
      %115 = sbr.rel (0) target = $region13
    $region12: #{tpu_custom_call.1} parent=1 // pred_region
      %117 = vsyncadd [#allocation6], 0
      %s118 = sshll.u32 [#allocation7], 4
      %s119 = int_to_ptr.vmem [resolvable:$true] %s118
      %s120 = sshll.u32 %s2, 4
      %s121 = int_to_ptr.hbm [resolvable:$true] %s120
      %126 = dma.vmem_to_hbm [thread:$0]  %s119, 256, %s121, [#allocation6], 128, 128, 8
    $region13: #{tpu_custom_call.1} parent=1 // pred_fallthru
      _
    // Predicated region
    $region14: #{tpu_custom_call.1} parent=1 // pred_check
      _
    $region15: #{tpu_custom_call.1} parent=1 // pred_check_branch
      %128 = sbr.rel (0) target = $region17
    $region16: #{tpu_custom_call.1} parent=1 // pred_region
      %130 = dma.done [#allocation6], 256
    $region17: #{tpu_custom_call.1} parent=1 // pred_fallthru
      _
    %131 = vsyncpa [#allocation5], 1
    %132 = vsyncpa [#allocation6], 1

</llo_original>
